<compile_context>
chip_gen: v6e
topology: v6e:2x2x1
jax: 0.10.0
libtpu: 0.0.40
codegen_flags: <defaults>
</compile_context>

<pallas_src>
import functools
import math

import jax
import jax.numpy as jnp
from jax.experimental import pallas as pl
from jax.experimental.pallas import tpu as pltpu


# ----------------------------------------------------------------------------
# Tile-size helpers (respect the (8, 128) block constraints; fall back to the
# full dim when it is not tileable).
# ----------------------------------------------------------------------------
def _pick_tile(dim, pref, align):
    """Largest tile <= pref that divides `dim` and is `align`-aligned, else dim."""
    t = (min(dim, pref) // align) * align
    while t >= align:
        if dim % t == 0:
            return t
        t -= align
    # TODO(synk): pad + mask tails instead of a full-dim fallback so huge,
    # non-tileable dims (e.g. N=197) cannot blow past scoped VMEM on v7x.
    return dim


# ----------------------------------------------------------------------------
# Tiled matmul (used for both the qkv projection and the output projection).
# ----------------------------------------------------------------------------
def _matmul_kernel(x_ref, w_ref, o_ref, acc_ref):
    @pl.when(pl.program_id(2) == 0)
    def _init():
        acc_ref[...] = jnp.zeros_like(acc_ref)

    acc_ref[...] += jnp.dot(
        x_ref[...], w_ref[...], preferred_element_type=jnp.float32
    )

    @pl.when(pl.program_id(2) == pl.num_programs(2) - 1)
    def _store():
        o_ref[...] = acc_ref[...].astype(o_ref.dtype)


def _linear(x2d, w, out_dtype=None, tm_pref=512, tn_pref=512, tk_pref=None):
    """x2d: (M, K), w: (K, N) -> (M, N) via a tiled, pipelined Pallas matmul."""
    M, K = x2d.shape
    K2, N = w.shape
    assert K == K2
    if out_dtype is None:
        out_dtype = x2d.dtype
    if tk_pref is None:
        # bf16 can afford a deeper K tile; f32 stays at 256 to keep the
        # double-buffered working set small on every generation.
        tk_pref = 512 if x2d.dtype == jnp.bfloat16 else 256

    tm = _pick_tile(M, tm_pref, 8)
    tn = _pick_tile(N, tn_pref, 128)
    tk = _pick_tile(K, tk_pref, 128)
    grid = (M // tm, N // tn, K // tk)

    return pl.pallas_call(
        _matmul_kernel,
        out_shape=jax.ShapeDtypeStruct((M, N), out_dtype),
        grid_spec=pltpu.PrefetchScalarGridSpec(
            num_scalar_prefetch=0,
            grid=grid,
            in_specs=[
                pl.BlockSpec((tm, tk), lambda i, j, k: (i, k)),
                pl.BlockSpec((tk, tn), lambda i, j, k: (k, j)),
            ],
            out_specs=pl.BlockSpec((tm, tn), lambda i, j, k: (i, j)),
            scratch_shapes=[pltpu.VMEM((tm, tn), jnp.float32)],
        ),
        compiler_params=pltpu.CompilerParams(
            dimension_semantics=("parallel", "parallel", "arbitrary"),
            vmem_limit_bytes=32 * 1024 * 1024,
        ),
    )(x2d, w)


# ----------------------------------------------------------------------------
# Flash-style attention reading q/k/v straight out of the (B, N, 3C) qkv array.
# Softmax scale is pre-folded into the q columns of the qkv weight.
# ----------------------------------------------------------------------------
def _flash_attn_kernel(q_ref, k_ref, v_ref, o_ref, m_ref, l_ref, acc_ref,
                       *, heads_per_block, head_dim):
    ki = pl.program_id(3)

    @pl.when(ki == 0)
    def _init():
        m_ref[...] = jnp.full_like(m_ref, -jnp.inf)
        l_ref[...] = jnp.zeros_like(l_ref)
        acc_ref[...] = jnp.zeros_like(acc_ref)

    # Load each operand block once, full 128-lane width (no per-head masked
    # ref slices); per-head slicing below happens on the loaded values.
    q_blk = q_ref[0]          # (tq, bw), input dtype (scale already folded in)
    k_blk = k_ref[0]          # (tk, bw)
    v_blk = v_ref[0]          # (tk, bw)

    # Static loop over the (small) number of heads packed into this 128-wide
    # lane block; each head is an independent 2-D attention problem and fully
    # retires before the next starts (keeps vreg pressure bounded).
    for h in range(heads_per_block):
        sl = slice(h * head_dim, (h + 1) * head_dim)
        q = q_blk[:, sl]                    # (tq, Dh)
        k = k_blk[:, sl]                    # (tk, Dh)
        v = v_blk[:, sl]                    # (tk, Dh)

        # QK^T without an explicit transpose: contract the last dims of both.
        s = jax.lax.dot_general(
            q, k, (((1,), (1,)), ((), ())),
            preferred_element_type=jnp.float32,
        )                                   # (tq, tk) f32

        m_prev = m_ref[h]                                    # (tq, 1)
        m_new = jnp.maximum(m_prev, jnp.max(s, axis=-1, keepdims=True))
        alpha = jnp.exp(m_prev - m_new)
        p = jnp.exp(s - m_new)                               # (tq, tk) f32
        l_ref[h] = alpha * l_ref[h] + jnp.sum(p, axis=-1, keepdims=True)
        acc_ref[h] = alpha * acc_ref[h] + jnp.dot(
            p.astype(v.dtype), v, preferred_element_type=jnp.float32
        )
        m_ref[h] = m_new

    @pl.when(ki == pl.num_programs(3) - 1)
    def _finalize():
        # Assemble all heads into one lane-dense (tq, bw) slab and issue a
        # single unmasked full-width store (avoids 64-lane vst.msk stores).
        parts = []
        for h in range(heads_per_block):
            inv_l = pl.reciprocal(l_ref[h], approx=True)     # EUP slot
            parts.append(acc_ref[h] * inv_l)
        blk = parts[0] if heads_per_block == 1 else jnp.concatenate(parts, axis=-1)
        o_ref[0] = blk.astype(o_ref.dtype)


def _attention(qkv, *, num_heads, head_dim, out_dtype, tq_pref=256, tk_pref=256):
    """qkv: (B, N, 3C) with last dim laid out (3, H, Dh) -> out (B, N, C)."""
    B, N, three_c = qkv.shape
    C = num_heads * head_dim
    assert three_c == 3 * C

    # Head-block width: smallest multiple of head_dim that is lane-aligned.
    bw = head_dim * 128 // math.gcd(head_dim, 128)      # lcm(head_dim, 128)
    hp = bw // head_dim                                  # heads per block
    # TODO(synk): add a padded fallback path when C is not a multiple of 128.
    assert C % bw == 0, "num_heads*head_dim must be a multiple of lcm(head_dim, 128)"
    n_hblk = C // bw                                     # head-blocks per q/k/v

    tq = _pick_tile(N, tq_pref, 8)
    tk = _pick_tile(N, tk_pref, 8)
    grid = (B, n_hblk, N // tq, N // tk)

    q_spec = pl.BlockSpec((1, tq, bw), lambda b, p, qi, ki: (b, qi, p))
    k_spec = pl.BlockSpec((1, tk, bw), lambda b, p, qi, ki: (b, ki, n_hblk + p))
    v_spec = pl.BlockSpec((1, tk, bw), lambda b, p, qi, ki: (b, ki, 2 * n_hblk + p))
    o_spec = pl.BlockSpec((1, tq, bw), lambda b, p, qi, ki: (b, qi, p))

    kernel = functools.partial(
        _flash_attn_kernel, heads_per_block=hp, head_dim=head_dim
    )
    return pl.pallas_call(
        kernel,
        out_shape=jax.ShapeDtypeStruct((B, N, C), out_dtype),
        grid_spec=pltpu.PrefetchScalarGridSpec(
            num_scalar_prefetch=0,
            grid=grid,
            in_specs=[q_spec, k_spec, v_spec],
            out_specs=o_spec,
            scratch_shapes=[
                pltpu.VMEM((hp, tq, 1), jnp.float32),          # running max m
                pltpu.VMEM((hp, tq, 1), jnp.float32),          # running sum l
                pltpu.VMEM((hp, tq, head_dim), jnp.float32),   # running acc
            ],
        ),
        compiler_params=pltpu.CompilerParams(
            dimension_semantics=("parallel", "parallel", "parallel", "arbitrary"),
            vmem_limit_bytes=32 * 1024 * 1024,
        ),
    )(qkv, qkv, qkv)   # same array, three views (q / k / v column blocks)


# ----------------------------------------------------------------------------
# Module wrapper
# ----------------------------------------------------------------------------
def self_attention_forward(x, w_qkv, w_proj, head_dim=64, qk_scale=None):
    """Pallas implementation of SelfAttention.forward.

    x:      (B, N, C)
    w_qkv:  (C, 3C)   -- pre-transposed qkv.weight  (qkv_bias=False)
    w_proj: (C, C)    -- pre-transposed proj.weight (bias=False)
    """
    B, N, C = x.shape
    assert C % head_dim == 0, "dim must be divisible by head_dim"
    H = C // head_dim
    assert w_qkv.shape == (C, 3 * C) and w_proj.shape == (C, C)
    scale = head_dim ** (-0.5) if qk_scale is None else qk_scale

    # Fold the softmax scale into the q columns of the qkv weight: a one-time
    # (C, 3C) constant op instead of per-kv-step multiplies inside the kernel.
    col_scale = jnp.concatenate(
        [jnp.full((C,), scale, dtype=w_qkv.dtype),
         jnp.ones((2 * C,), dtype=w_qkv.dtype)]
    )
    w_qkv_scaled = w_qkv * col_scale[None, :]

    # qkv projection (tiled matmul): (B*N, C) @ (C, 3C) -> (B, N, 3C).
    qkv = _linear(x.reshape(B * N, C), w_qkv_scaled).reshape(B, N, 3 * C)

    # Flash attention directly on the (B, N, 3C) layout; output lands in
    # (B, N, H*Dh) = (B, N, C) order, so no HBM transpose is needed afterwards.
    o = _attention(qkv, num_heads=H, head_dim=head_dim, out_dtype=x.dtype)

    # Output projection (tiled matmul). attn_drop / proj_drop are 0.0 -> identity.
    return _linear(o.reshape(B * N, C), w_proj).reshape(B, N, C)


# Pure-JAX reference for verification.
def _reference(x, w_qkv, w_proj, head_dim=64):
    B, N, C = x.shape
    H = C // head_dim
    scale = head_dim ** (-0.5)
    qkv = (x.reshape(B * N, C) @ w_qkv).reshape(B, N, 3, H, head_dim)
    qkv = jnp.transpose(qkv, (2, 0, 3, 1, 4))
    q, k, v = qkv[0], qkv[1], qkv[2]
    s = jnp.einsum("bhnd,bhmd->bhnm", q, k) * scale
    p = jax.nn.softmax(s, axis=-1)
    o = jnp.einsum("bhnm,bhmd->bhnd", p, v)
    o = jnp.transpose(o, (0, 2, 1, 3)).reshape(B, N, C)
    return (o.reshape(B * N, C) @ w_proj).reshape(B, N, C)


if __name__ == "__main__":
    B, L, head_dim, H = 2, 8, 64, 2
    D = head_dim * H  # 128

    key = jax.random.PRNGKey(0)
    kx, kqkv, kproj = jax.random.split(key, 3)

    x = jax.random.normal(kx, (B, L, D), dtype=jnp.float32)
    # Deterministic "linear layer" weights, stored as (in, out) = W^T.
    w_qkv = jax.random.normal(kqkv, (D, 3 * D), dtype=jnp.float32) * (D ** -0.5)
    w_proj = jax.random.normal(kproj, (D, D), dtype=jnp.float32) * (D ** -0.5)

    out = self_attention_forward(x, w_qkv, w_proj, head_dim=head_dim)
    out = jax.block_until_ready(out)

    ref = _reference(x, w_qkv, w_proj, head_dim=head_dim)
    assert out.shape == (B, L, D)
    # Slightly loose tolerance: softmax denominator uses the EUP approximate
    # reciprocal (pl.reciprocal(..., approx=True)).
    assert jnp.allclose(out, ref, atol=5e-3, rtol=5e-3), "mismatch vs reference"

    print("KERNEL_OK")
</pallas_src>

<mosaic_0001>
module attributes {stable_mosaic.version = 11 : i64} {
  func.func @_matmul_kernel(%arg0: i32, %arg1: i32, %arg2: i32, %arg3: memref<16x128xf32, #tpu.memory_space<vmem>>, %arg4: memref<128x384xf32, #tpu.memory_space<vmem>>, %arg5: memref<16x384xf32, #tpu.memory_space<vmem>>, %arg6: memref<16x384xf32, #tpu.memory_space<vmem>>) attributes {dimension_semantics = [#tpu.dimension_semantics<parallel>, #tpu.dimension_semantics<parallel>, #tpu.dimension_semantics<arbitrary>], iteration_bounds = array<i64: 1, 1, 1>, scalar_prefetch = 0 : i64, scratch_operands = 1 : i64, tpu.core_type = #tpu.core_type<tc>, window_params = [{transform_indices = @transform_0, window_bounds = array<i64: 16, 128>}, {transform_indices = @transform_1, window_bounds = array<i64: 128, 384>}, {transform_indices = @transform_2, window_bounds = array<i64: 16, 384>}]} {
    %c0_i32 = arith.constant 0 : i32
    %0 = arith.cmpi eq, %arg2, %c0_i32 : i32
    %1 = arith.extui %0 : i1 to i32
    %c0_i32_0 = arith.constant 0 : i32
    %2 = arith.cmpi ne, %1, %c0_i32_0 : i32
    scf.if %2 {
      %cst_10 = arith.constant 0.000000e+00 : f32
      %12 = vector.broadcast %cst_10 : f32 to vector<16x384xf32>
      %c0_11 = arith.constant 0 : index
      %c0_12 = arith.constant 0 : index
      %13 = vector.load %arg6[%c0_11, %c0_12] : memref<16x384xf32, #tpu.memory_space<vmem>>, vector<16x384xf32>
      tpu.vector_store %arg6[%c0_11, %c0_12], %12 {strides = array<i32>} : memref<16x384xf32, #tpu.memory_space<vmem>>, vector<16x384xf32>,
    } else {
    }
    %c0 = arith.constant 0 : index
    %c0_1 = arith.constant 0 : index
    %3 = vector.load %arg6[%c0, %c0_1] : memref<16x384xf32, #tpu.memory_space<vmem>>, vector<16x384xf32>
    %c0_2 = arith.constant 0 : index
    %c0_3 = arith.constant 0 : index
    %4 = vector.load %arg3[%c0_2, %c0_3] : memref<16x128xf32, #tpu.memory_space<vmem>>, vector<16x128xf32>
    %c0_4 = arith.constant 0 : index
    %c0_5 = arith.constant 0 : index
    %5 = vector.load %arg4[%c0_4, %c0_5] : memref<128x384xf32, #tpu.memory_space<vmem>>, vector<128x384xf32>
    %cst = arith.constant dense<0.000000e+00> : vector<16x384xf32>
    %6 = tpu.matmul %4, %5, %cst {dimension_numbers = #tpu.dot_dimension_numbers<[1], [0], [0], [1], [0, 0, 1, 1], [], []>} : vector<16x128xf32>, vector<128x384xf32>, vector<16x384xf32> -> vector<16x384xf32>
    %7 = arith.addf %3, %6 : vector<16x384xf32>
    %c0_6 = arith.constant 0 : index
    %c0_7 = arith.constant 0 : index
    %8 = vector.load %arg6[%c0_6, %c0_7] : memref<16x384xf32, #tpu.memory_space<vmem>>, vector<16x384xf32>
    tpu.vector_store %arg6[%c0_6, %c0_7], %7 {strides = array<i32>} : memref<16x384xf32, #tpu.memory_space<vmem>>, vector<16x384xf32>,
    %c0_i32_8 = arith.constant 0 : i32
    %9 = arith.cmpi eq, %arg2, %c0_i32_8 : i32
    %10 = arith.extui %9 : i1 to i32
    %c0_i32_9 = arith.constant 0 : i32
    %11 = arith.cmpi ne, %10, %c0_i32_9 : i32
    scf.if %11 {
      %c0_10 = arith.constant 0 : index
      %c0_11 = arith.constant 0 : index
      %12 = vector.load %arg6[%c0_10, %c0_11] : memref<16x384xf32, #tpu.memory_space<vmem>>, vector<16x384xf32>
      %c0_12 = arith.constant 0 : index
      %c0_13 = arith.constant 0 : index
      %13 = vector.load %arg5[%c0_12, %c0_13] : memref<16x384xf32, #tpu.memory_space<vmem>>, vector<16x384xf32>
      tpu.vector_store %arg5[%c0_12, %c0_13], %12 {strides = array<i32>} : memref<16x384xf32, #tpu.memory_space<vmem>>, vector<16x384xf32>,
    } else {
    }
    return
  }
  func.func @transform_0(%arg0: i32, %arg1: i32, %arg2: i32) -> (i32, i32) {
    %c0_i32 = arith.constant 0 : i32
    return %arg0, %arg2 : i32, i32
  }
  func.func @transform_1(%arg0: i32, %arg1: i32, %arg2: i32) -> (i32, i32) {
    %c0_i32 = arith.constant 0 : i32
    return %arg2, %arg1 : i32, i32
  }
  func.func @transform_2(%arg0: i32, %arg1: i32, %arg2: i32) -> (i32, i32) {
    %c0_i32 = arith.constant 0 : i32
    return %arg0, %arg1 : i32, i32
  }
}

</mosaic_0001>

<llo_original>
// kernel: tpu_custom_call.1
$region0: #{tpu_custom_call.1}
  #allocation0 [shape = 'u32[]', space=smem, size = 0x4, offset = 0x4, fixed_abs, tag = 'smem constant byte address 0x4 - core index']
  #allocation1 [shape = 'u32[144,128]{1,0:T(1,128)}', space=vmem, size = 0x12000, scoped, tag = 'internal scratch']
  #allocation2 [shape = 'f32[16,384]{1,0:T(8,128)}', space=vmem, size = 0x6000, scoped, tag = 'scratch operand']
  %s0 = inlined_call_operand.hbm [shape: f32[16,128], index: 0, kind: input, shape index: {}]
  %s1 = inlined_call_operand.hbm [shape: f32[128,384], index: 1, kind: input, shape index: {}]
  %s2 = inlined_call_operand.hbm [shape: f32[16,384], index: 2, kind: output, shape index: {}]
  %s3 = sld [smem:[#allocation0]]
  $region34: #{tpu_custom_call.1} parent=0
    _
  %s5 = ssub.s32 1, %s3
  %s6 = scalar_select 0, %s5, %s3
  $region1: #{tpu_custom_call.1} parent=0
    #allocation3 [shape = 'u8[8192]{0}', space=vmem, size = 0x2000, scoped, tag = 'input window, operand 0, single buffered']
    #allocation4 [shape = 's32[1]{0}', space=sflag, size = 0x4, scoped, tag = 'scoped memory for tpu_custom_call.1']
    #allocation5 [shape = 's32[1]{0}', space=sflag, size = 0x4, scoped, tag = 'scoped memory for tpu_custom_call.1']
    #allocation6 [shape = 'u8[196608]{0}', space=vmem, size = 0x30000, scoped, tag = 'input window, operand 1, single buffered']
    #allocation7 [shape = 's32[1]{0}', space=sflag, size = 0x4, scoped, tag = 'scoped memory for tpu_custom_call.1']
    #allocation8 [shape = 'u8[24576]{0}', space=vmem, size = 0x6000, scoped, tag = 'output window, operand 0, single buffered']
    %7 = vsyncpa [#allocation4], 0
    %8 = vsyncpa [#allocation7], 0
    %9 = vsyncpa [#allocation5], 0
    // Predicated region
    $region2: #{tpu_custom_call.1} parent=1 // pred_check
      _
    $region3: #{tpu_custom_call.1} parent=1 // pred_check_branch
      %11 = sbr.rel (0) target = $region5
    $region4: #{tpu_custom_call.1} parent=1 // pred_region
      %s13 = ssub.s32 256, 256
      %14 = vsyncadd [#allocation4], %s13
      %s15 = sshll.u32 [#allocation3], 4
      %s16 = int_to_ptr.vmem [resolvable:$true] %s15
      %21 = dma.hbm_to_vmem [thread:$0]  %s0, 256, %s16, [#allocation4], 128, 128, 8
    $region5: #{tpu_custom_call.1} parent=1 // pred_fallthru
      _
    // Predicated region
    $region6: #{tpu_custom_call.1} parent=1 // pred_check
      _
    $region7: #{tpu_custom_call.1} parent=1 // pred_check_branch
      %23 = sbr.rel (0) target = $region9
    $region8: #{tpu_custom_call.1} parent=1 // pred_region
      %s25 = ssub.s32 6144, 6144
      %26 = vsyncadd [#allocation7], %s25
      %s27 = sshll.u32 [#allocation6], 4
      %s28 = int_to_ptr.vmem [resolvable:$true] %s27
      %33 = dma.hbm_to_vmem [thread:$0]  %s1, 6144, %s28, [#allocation7], 384, 384, 24
    $region9: #{tpu_custom_call.1} parent=1 // pred_fallthru
      _
    // Predicated region
    $region10: #{tpu_custom_call.1} parent=1 // pred_check
      _
    $region11: #{tpu_custom_call.1} parent=1 // pred_check_branch
      %35 = sbr.rel (0) target = $region13
    $region12: #{tpu_custom_call.1} parent=1 // pred_region
      %36 = dma.done [#allocation4], 256
    $region13: #{tpu_custom_call.1} parent=1 // pred_fallthru
      _
    // Predicated region
    $region14: #{tpu_custom_call.1} parent=1 // pred_check
      _
    $region15: #{tpu_custom_call.1} parent=1 // pred_check_branch
      %38 = sbr.rel (0) target = $region17
    $region16: #{tpu_custom_call.1} parent=1 // pred_region
      %39 = dma.done [#allocation7], 6144
    $region17: #{tpu_custom_call.1} parent=1 // pred_fallthru
      _
    %p40 = scmp.eq.s32.totalorder 0, 0
    // Predicated region
    $region18: #{tpu_custom_call.1} parent=1 // pred_check
      %p41 = pneg %p40
    $region19: #{tpu_custom_call.1} parent=1 // pred_check_branch
      %43 = sbr.rel (%p41) target = $region21
    $region20: #{tpu_custom_call.1} parent=1 // pred_region
      %44 = vst [vmem:[#allocation2] sm:$0xff] 0.0
      %45 = vst [vmem:[#allocation2 + $0x8] sm:$0xff] 0.0
      %46 = vst [vmem:[#allocation2 + $0x10] sm:$0xff] 0.0
      %47 = vst [vmem:[#allocation2 + $0x18] sm:$0xff] 0.0
      %48 = vst [vmem:[#allocation2 + $0x20] sm:$0xff] 0.0
      %49 = vst [vmem:[#allocation2 + $0x28] sm:$0xff] 0.0
    $region21: #{tpu_custom_call.1} parent=1 // pred_fallthru
      _
    %v50 = vld [vmem:[#allocation2] sm:$0xff]
    %v51 = vld [vmem:[#allocation2 + $0x8] sm:$0xff]
    %v52 = vld [vmem:[#allocation2 + $0x10] sm:$0xff]
    %v53 = vld [vmem:[#allocation2 + $0x18] sm:$0xff]
    %v54 = vld [vmem:[#allocation2 + $0x20] sm:$0xff]
    %v55 = vld [vmem:[#allocation2 + $0x28] sm:$0xff]
    %v56 = vld [vmem:[#allocation3] sm:$0xff]
    %v57 = vld [vmem:[#allocation3 + $0x8] sm:$0xff]
    %v58 = vld [vmem:[#allocation6] sm:$0xff]
    %v59 = vld [vmem:[#allocation6 + $0x8] sm:$0xff]
    %v60 = vld [vmem:[#allocation6 + $0x10] sm:$0xff]
    %v61 = vld [vmem:[#allocation6 + $0x18] sm:$0xff]
    %v62 = vld [vmem:[#allocation6 + $0x20] sm:$0xff]
    %v63 = vld [vmem:[#allocation6 + $0x28] sm:$0xff]
    %v64 = vld [vmem:[#allocation6 + $0x30] sm:$0xff]
    %v65 = vld [vmem:[#allocation6 + $0x38] sm:$0xff]
    %v66 = vld [vmem:[#allocation6 + $0x40] sm:$0xff]
    %v67 = vld [vmem:[#allocation6 + $0x48] sm:$0xff]
    %v68 = vld [vmem:[#allocation6 + $0x50] sm:$0xff]
    %v69 = vld [vmem:[#allocation6 + $0x58] sm:$0xff]
    %v70 = vld [vmem:[#allocation6 + $0x60] sm:$0xff]
    %v71 = vld [vmem:[#allocation6 + $0x68] sm:$0xff]
    %v72 = vld [vmem:[#allocation6 + $0x70] sm:$0xff]
    %v73 = vld [vmem:[#allocation6 + $0x78] sm:$0xff]
    %v74 = vld [vmem:[#allocation6 + $0x80] sm:$0xff]
    %v75 = vld [vmem:[#allocation6 + $0x88] sm:$0xff]
    %v76 = vld [vmem:[#allocation6 + $0x90] sm:$0xff]
    %v77 = vld [vmem:[#allocation6 + $0x98] sm:$0xff]
    %v78 = vld [vmem:[#allocation6 + $0xa0] sm:$0xff]
    %v79 = vld [vmem:[#allocation6 + $0xa8] sm:$0xff]
    %v80 = vld [vmem:[#allocation6 + $0xb0] sm:$0xff]
    %v81 = vld [vmem:[#allocation6 + $0xb8] sm:$0xff]
    %v82 = vld [vmem:[#allocation6 + $0xc0] sm:$0xff]
    %v83 = vld [vmem:[#allocation6 + $0xc8] sm:$0xff]
    %v84 = vld [vmem:[#allocation6 + $0xd0] sm:$0xff]
    %v85 = vld [vmem:[#allocation6 + $0xd8] sm:$0xff]
    %v86 = vld [vmem:[#allocation6 + $0xe0] sm:$0xff]
    %v87 = vld [vmem:[#allocation6 + $0xe8] sm:$0xff]
    %v88 = vld [vmem:[#allocation6 + $0xf0] sm:$0xff]
    %v89 = vld [vmem:[#allocation6 + $0xf8] sm:$0xff]
    %v90 = vld [vmem:[#allocation6 + $0x100] sm:$0xff]
    %v91 = vld [vmem:[#allocation6 + $0x108] sm:$0xff]
    %v92 = vld [vmem:[#allocation6 + $0x110] sm:$0xff]
    %v93 = vld [vmem:[#allocation6 + $0x118] sm:$0xff]
    %v94 = vld [vmem:[#allocation6 + $0x120] sm:$0xff]
    %v95 = vld [vmem:[#allocation6 + $0x128] sm:$0xff]
    %v96 = vld [vmem:[#allocation6 + $0x130] sm:$0xff]
    %v97 = vld [vmem:[#allocation6 + $0x138] sm:$0xff]
    %v98 = vld [vmem:[#allocation6 + $0x140] sm:$0xff]
    %v99 = vld [vmem:[#allocation6 + $0x148] sm:$0xff]
    %v100 = vld [vmem:[#allocation6 + $0x150] sm:$0xff]
    %v101 = vld [vmem:[#allocation6 + $0x158] sm:$0xff]
    %v102 = vld [vmem:[#allocation6 + $0x160] sm:$0xff]
    %v103 = vld [vmem:[#allocation6 + $0x168] sm:$0xff]
    %v104 = vld [vmem:[#allocation6 + $0x170] sm:$0xff]
    %v105 = vld [vmem:[#allocation6 + $0x178] sm:$0xff]
    %106 = vmatprep.subr.mxu0 %v104
    %107 = vmatpush1.msra.mxu0 %v103
    %108 = vmatprep.subr.mxu0 %v101
    %109 = vmatpush1.msra.mxu0 %v100
    %110 = vmatprep.subr.mxu0 %v98
    %111 = vmatpush1.msra.mxu0 %v97
    %112 = vmatprep.subr.mxu0 %v95
    %113 = vmatpush1.msra.mxu0 %v94
    %114 = vmatprep.subr.mxu0 %v92
    %115 = vmatpush1.msra.mxu0 %v91
    %116 = vmatprep.subr.mxu0 %v89
    %117 = vmatpush1.msra.mxu0 %v88
    %118 = vmatprep.subr.mxu0 %v86
    %119 = vmatpush1.msra.mxu0 %v85
    %120 = vmatprep.subr.mxu0 %v83
    %121 = vmatpush1.msra.mxu0 %v82
    %122 = vmatprep.subr.mxu0 %v80
    %123 = vmatpush1.msra.mxu0 %v79
    %124 = vmatprep.subr.mxu0 %v77
    %125 = vmatpush1.msra.mxu0 %v76
    %126 = vmatprep.subr.mxu0 %v74
    %127 = vmatpush1.msra.mxu0 %v73
    %128 = vmatprep.subr.mxu0 %v71
    %129 = vmatpush1.msra.mxu0 %v70
    %130 = vmatprep.subr.mxu0 %v68
    %131 = vmatpush1.msra.mxu0 %v67
    %132 = vmatprep.subr.mxu0 %v65
    %133 = vmatpush1.msra.mxu0 %v64
    %134 = vmatprep.subr.mxu0 %v62
    %135 = vmatpush1.msra.mxu0 %v61
    %136 = vmatprep.subr.mxu0 %v59
    %137 = vmatpush1.msra.mxu0 %v58
    %138 = vmatprep.subr.mxu0 0.0
    %139 = vmatpush2.msra.mxu0 0.0
    %140 = vmatprep.subr.mxu0 0.0
    %141 = vmatpush2.msra.mxu0 0.0
    %142 = vmatprep.subr.mxu0 0.0
    %143 = vmatpush2.msra.mxu0 0.0
    %144 = vmatprep.subr.mxu0 0.0
    %145 = vmatpush2.msra.mxu0 0.0
    %146 = vmatprep.subr.mxu0 0.0
    %147 = vmatpush2.msra.mxu0 0.0
    %148 = vmatprep.subr.mxu0 0.0
    %149 = vmatpush2.msra.mxu0 0.0
    %150 = vmatprep.subr.mxu0 0.0
    %151 = vmatpush2.msra.mxu0 0.0
    %152 = vmatprep.subr.mxu0 0.0
    %153 = vmatpush2.msra.mxu0 0.0
    %154 = vmatprep.subr.mxu0 0.0
    %155 = vmatpush2.msra.mxu0 0.0
    %156 = vmatprep.subr.mxu0 0.0
    %157 = vmatpush2.msra.mxu0 0.0
    %158 = vmatprep.subr.mxu0 0.0
    %159 = vmatpush2.msra.mxu0 0.0
    %160 = vmatprep.subr.mxu0 0.0
    %161 = vmatpush2.msra.mxu0 0.0
    %162 = vmatprep.subr.mxu0 0.0
    %163 = vmatpush2.msra.mxu0 0.0
    %164 = vmatprep.subr.mxu0 0.0
    %165 = vmatpush2.msra.mxu0 0.0
    %166 = vmatprep.subr.mxu0 0.0
    %167 = vmatpush2.msra.mxu0 0.0
    %168 = vmatprep.subr.mxu0 0.0
    %169 = vmatpush2.msra.mxu0 0.0
    %170 = vmatprep.mubr.f32.mxu0 0.0
    %171 = vmatmul.mubr.f32.gmra.mxu0 %v56
    %v172 = vpop.f32.mrf.mxu0
    %v173 = vadd.f32 0.0, %v172
    %v174 = vpop.f32.mrf.mxu0
    %v175 = vadd.f32 0.0, %v174
    %176 = vmatprep.mubr.f32.mxu0 0.0
    %177 = vmatmul.mubr.f32.gmra.mxu0 %v57
    %v178 = vpop.f32.mrf.mxu0
    %v179 = vadd.f32 0.0, %v178
    %v180 = vpop.f32.mrf.mxu0
    %v181 = vadd.f32 0.0, %v180
    %182 = vdwg.mxu0
    %183 = vmatprep.subr.mxu0 0.0
    %184 = vmatpush1.msra.mxu0 %v105
    %185 = vmatprep.subr.mxu0 0.0
    %186 = vmatpush1.msra.mxu0 %v102
    %187 = vmatprep.subr.mxu0 0.0
    %188 = vmatpush1.msra.mxu0 %v99
    %189 = vmatprep.subr.mxu0 0.0
    %190 = vmatpush1.msra.mxu0 %v96
    %191 = vmatprep.subr.mxu0 0.0
    %192 = vmatpush1.msra.mxu0 %v93
    %193 = vmatprep.subr.mxu0 0.0
    %194 = vmatpush1.msra.mxu0 %v90
    %195 = vmatprep.subr.mxu0 0.0
    %196 = vmatpush1.msra.mxu0 %v87
    %197 = vmatprep.subr.mxu0 0.0
    %198 = vmatpush1.msra.mxu0 %v84
    %199 = vmatprep.subr.mxu0 0.0
    %200 = vmatpush1.msra.mxu0 %v81
    %201 = vmatprep.subr.mxu0 0.0
    %202 = vmatpush1.msra.mxu0 %v78
    %203 = vmatprep.subr.mxu0 0.0
    %204 = vmatpush1.msra.mxu0 %v75
    %205 = vmatprep.subr.mxu0 0.0
    %206 = vmatpush1.msra.mxu0 %v72
    %207 = vmatprep.subr.mxu0 0.0
    %208 = vmatpush1.msra.mxu0 %v69
    %209 = vmatprep.subr.mxu0 0.0
    %210 = vmatpush1.msra.mxu0 %v66
    %211 = vmatprep.subr.mxu0 0.0
    %212 = vmatpush1.msra.mxu0 %v63
    %213 = vmatprep.subr.mxu0 0.0
    %214 = vmatpush1.msra.mxu0 %v60
    %215 = vmatprep.subr.mxu0 0.0
    %216 = vmatpush2.msra.mxu0 0.0
    %217 = vmatprep.subr.mxu0 0.0
    %218 = vmatpush2.msra.mxu0 0.0
    %219 = vmatprep.subr.mxu0 0.0
    %220 = vmatpush2.msra.mxu0 0.0
    %221 = vmatprep.subr.mxu0 0.0
    %222 = vmatpush2.msra.mxu0 0.0
    %223 = vmatprep.subr.mxu0 0.0
    %224 = vmatpush2.msra.mxu0 0.0
    %225 = vmatprep.subr.mxu0 0.0
    %226 = vmatpush2.msra.mxu0 0.0
    %227 = vmatprep.subr.mxu0 0.0
    %228 = vmatpush2.msra.mxu0 0.0
    %229 = vmatprep.subr.mxu0 0.0
    %230 = vmatpush2.msra.mxu0 0.0
    %231 = vmatprep.subr.mxu0 0.0
    %232 = vmatpush2.msra.mxu0 0.0
    %233 = vmatprep.subr.mxu0 0.0
    %234 = vmatpush2.msra.mxu0 0.0
    %235 = vmatprep.subr.mxu0 0.0
    %236 = vmatpush2.msra.mxu0 0.0
    %237 = vmatprep.subr.mxu0 0.0
    %238 = vmatpush2.msra.mxu0 0.0
    %239 = vmatprep.subr.mxu0 0.0
    %240 = vmatpush2.msra.mxu0 0.0
    %241 = vmatprep.subr.mxu0 0.0
    %242 = vmatpush2.msra.mxu0 0.0
    %243 = vmatprep.subr.mxu0 0.0
    %244 = vmatpush2.msra.mxu0 0.0
    %245 = vmatprep.subr.mxu0 0.0
    %246 = vmatpush2.msra.mxu0 0.0
    %247 = vmatprep.mubr.f32.mxu0 0.0
    %248 = vmatmul.mubr.f32.gmra.mxu0 %v56
    %v249 = vpop.f32.mrf.mxu0
    %v250 = vadd.f32 0.0, %v249
    %v251 = vpop.f32.mrf.mxu0
    %252 = vmatprep.mubr.f32.mxu0 0.0
    %253 = vmatmul.mubr.f32.gmra.mxu0 %v57
    %v254 = vpop.f32.mrf.mxu0
    %v255 = vadd.f32 0.0, %v254
    %v256 = vpop.f32.mrf.mxu0
    %257 = vdwg.mxu0
    %v258 = vadd.f32 %v50, %v173
    %v259 = vadd.f32 %v51, %v175
    %v260 = vadd.f32 %v52, %v250
    %v261 = vadd.f32 %v53, %v179
    %v262 = vadd.f32 %v54, %v181
    %v263 = vadd.f32 %v55, %v255
    %264 = vst [vmem:[#allocation2] sm:$0xff] %v258
    %265 = vst [vmem:[#allocation2 + $0x8] sm:$0xff] %v259
    %266 = vst [vmem:[#allocation2 + $0x10] sm:$0xff] %v260
    %267 = vst [vmem:[#allocation2 + $0x18] sm:$0xff] %v261
    %268 = vst [vmem:[#allocation2 + $0x20] sm:$0xff] %v262
    %269 = vst [vmem:[#allocation2 + $0x28] sm:$0xff] %v263
    // Predicated region
    $region22: #{tpu_custom_call.1} parent=1 // pred_check
      %p270 = pneg %p40
    $region23: #{tpu_custom_call.1} parent=1 // pred_check_branch
      %272 = sbr.rel (%p270) target = $region25
    $region24: #{tpu_custom_call.1} parent=1 // pred_region
      %v273 = vld [vmem:[#allocation2] sm:$0xff]
      %v274 = vld [vmem:[#allocation2 + $0x8] sm:$0xff]
      %v275 = vld [vmem:[#allocation2 + $0x10] sm:$0xff]
      %v276 = vld [vmem:[#allocation2 + $0x18] sm:$0xff]
      %v277 = vld [vmem:[#allocation2 + $0x20] sm:$0xff]
      %v278 = vld [vmem:[#allocation2 + $0x28] sm:$0xff]
      %279 = vst [vmem:[#allocation8] sm:$0xff] %v273
      %280 = vst [vmem:[#allocation8 + $0x8] sm:$0xff] %v274
      %281 = vst [vmem:[#allocation8 + $0x10] sm:$0xff] %v275
      %282 = vst [vmem:[#allocation8 + $0x18] sm:$0xff] %v276
      %283 = vst [vmem:[#allocation8 + $0x20] sm:$0xff] %v277
      %284 = vst [vmem:[#allocation8 + $0x28] sm:$0xff] %v278
    $region25: #{tpu_custom_call.1} parent=1 // pred_fallthru
      _
    // Predicated region
    $region26: #{tpu_custom_call.1} parent=1 // pred_check
      _
    $region27: #{tpu_custom_call.1} parent=1 // pred_check_branch
      %286 = sbr.rel (0) target = $region29
    $region28: #{tpu_custom_call.1} parent=1 // pred_region
      %s288 = ssub.s32 768, 768
      %289 = vsyncadd [#allocation5], %s288
      %s290 = sshll.u32 [#allocation8], 4
      %s291 = int_to_ptr.vmem [resolvable:$true] %s290
      %296 = dma.vmem_to_hbm [thread:$0]  %s291, 768, %s2, [#allocation5], 384, 384, 24
    $region29: #{tpu_custom_call.1} parent=1 // pred_fallthru
      _
    // Predicated region
    $region30: #{tpu_custom_call.1} parent=1 // pred_check
      _
    $region31: #{tpu_custom_call.1} parent=1 // pred_check_branch
      %298 = sbr.rel (0) target = $region33
    $region32: #{tpu_custom_call.1} parent=1 // pred_region
      %299 = dma.done [#allocation5], 768
    $region33: #{tpu_custom_call.1} parent=1 // pred_fallthru
      _
    %300 = vsyncpa [#allocation4], 1
    %301 = vsyncpa [#allocation7], 1
    %302 = vsyncpa [#allocation5], 1

</llo_original>
